<compile_context>
chip_gen: v7x
topology: tpu7x:2x2x1
jax: 0.10.0
libtpu: 0.0.40
codegen_flags: <defaults>
</compile_context>

<pallas_src>
import functools

import jax
import jax.numpy as jnp
from jax import lax
from jax.experimental import pallas as pl
from jax.experimental.pallas import tpu as pltpu


def _round_up(x, m):
    return (x + m - 1) // m * m


_VMEM_LIMIT = 32 * 1024 * 1024  # explicit scoped-VMEM limit (safe on v5e/v6e/v7x)


# --------------------- Kernel A: fused QKV projection ---------------------
def _qkv_proj_kernel(x_ref, w_ref, qkv_ref):
    # One MXU pass per (row tile, column tile): (tile, d_in) @ (d_in, ct).
    qkv_ref[...] = jnp.dot(
        x_ref[...], w_ref[...], preferred_element_type=jnp.float32
    ).astype(qkv_ref.dtype)


# ------------------- Kernel B: flash-style attention ----------------------
def _flash_attn_kernel(q_ref, kv_ref, o_ref, m_sc, l_sc, acc_sc, *,
                       d_pad, seq_len, tk, needs_mask):
    ki = pl.program_id(1)
    last_kv = pl.num_programs(1) - 1

    @pl.when(ki == 0)
    def _():
        m_sc[...] = jnp.full_like(m_sc, -jnp.inf)
        l_sc[...] = jnp.zeros_like(l_sc)
        acc_sc[...] = jnp.zeros_like(acc_sc)

    # Single fused K|V block; static 128-aligned slices are free.
    k = kv_ref[:, :d_pad]
    v = kv_ref[:, d_pad:]

    # scores = q @ k.T without materializing a transpose (contract lane dims).
    # Scale is already folded into W_query.
    s = lax.dot_general(
        q_ref[...], k,
        dimension_numbers=(((1,), (1,)), ((), ())),
        preferred_element_type=jnp.float32,
    )

    def update(scores):
        # Online (streaming) softmax update into resident scratch.
        m_prev = m_sc[...]
        m_new = jnp.maximum(m_prev, jnp.max(scores, axis=-1, keepdims=True))
        alpha = jnp.exp(m_prev - m_new)
        p = jnp.exp(scores - m_new)
        l_sc[...] = alpha * l_sc[...] + jnp.sum(p, axis=-1, keepdims=True)
        acc_sc[...] = alpha * acc_sc[...] + jnp.dot(
            p.astype(v.dtype), v, preferred_element_type=jnp.float32)
        m_sc[...] = m_new

    if needs_mask:
        # Only the final visited kv block contains padded positions; all fully
        # padded blocks are outside the kv grid (grid = cdiv(T, tk) blocks).
        @pl.when(ki < last_kv)
        def _():
            update(s)

        @pl.when(ki == last_kv)
        def _():
            kv_pos = ki * tk + lax.broadcasted_iota(jnp.int32, s.shape, 1)
            update(jnp.where(kv_pos < seq_len, s, -1e30))
    else:
        update(s)

    @pl.when(ki == last_kv)
    def _():
        inv_l = pl.reciprocal(l_sc[...], approx=True)   # EUP vrcp, free slot
        o_ref[...] = (acc_sc[...] * inv_l).astype(o_ref.dtype)


# ------------------------------ Wrapper ------------------------------------
def self_attention_v1(x, w_query, w_key, w_value):
    """x: (T, d_in); w_*: (d_in, d_out). Returns (T, d_out)."""
    T, d_in = x.shape
    d_out = w_query.shape[1]
    scale = 1.0 / float(d_out) ** 0.5            # matches keys.shape[-1] ** 0.5

    # Lane-dense head dim: pad d_out up to a multiple of 128 with zero columns
    # (zero q/k columns contribute 0 to scores; zero v columns give zero output
    # columns that are sliced off).  For d_out > 128 pad to 256 multiples so the
    # 2x256^2 MXUs (v6e/v7x) are fully fed.
    d_pad = _round_up(max(d_out, 128), 256 if d_out > 128 else 128)

    def _pad_w(w):
        return jnp.pad(w, ((0, 0), (0, d_pad - d_out)))

    # Fused weight, order [K | V | Q*scale]: K+V are one contiguous 2*d_pad
    # column slab (single DMA per kv step in Kernel B); scale folded into Q.
    w_kvq = jnp.concatenate(
        [_pad_w(w_key), _pad_w(w_value), _pad_w(w_query * scale)], axis=1
    )                                            # (d_in, 3 * d_pad)

    # Sequence tiling: decouple q tile from kv tile for long sequences.
    t8 = _round_up(T, 8)
    tq = min(512, t8)
    tk = 256 if t8 > 1024 else tq
    t_pad = _round_up(T, tq)
    x_pad = jnp.pad(x, ((0, t_pad - T), (0, 0)))

    n_kv_blocks = pl.cdiv(T, tk)                 # never visit fully padded blocks
    needs_mask = (n_kv_blocks * tk != T)

    # ---- Kernel A: fused, pipelined QKV projection (bf16 output) ----
    tile_a = min(512, t_pad)                     # streaming / mem-bound tile
    col_tile = 3 * d_pad if 3 * d_pad <= 1536 else d_pad
    # NOTE: for very large d_in an additional K-reduction grid axis over d_in
    # (f32 accumulator, "arbitrary") would keep the weight block within VMEM.
    qkv = pl.pallas_call(
        _qkv_proj_kernel,
        out_shape=jax.ShapeDtypeStruct((t_pad, 3 * d_pad), jnp.bfloat16),
        grid_spec=pltpu.PrefetchScalarGridSpec(
            num_scalar_prefetch=0,
            grid=(t_pad // tile_a, (3 * d_pad) // col_tile),
            in_specs=[
                pl.BlockSpec((tile_a, d_in), lambda i, j: (i, 0)),
                pl.BlockSpec((d_in, col_tile), lambda i, j: (0, j)),
            ],
            out_specs=pl.BlockSpec((tile_a, col_tile), lambda i, j: (i, j)),
        ),
        compiler_params=pltpu.CompilerParams(
            dimension_semantics=("parallel", "parallel"),
            vmem_limit_bytes=_VMEM_LIMIT),
    )(x_pad, w_kvq)

    # ---- Kernel B: flash attention over (q blocks, kv blocks) ----
    kernel = functools.partial(_flash_attn_kernel, d_pad=d_pad, seq_len=T,
                               tk=tk, needs_mask=needs_mask)
    out_pad = pl.pallas_call(
        kernel,
        out_shape=jax.ShapeDtypeStruct((t_pad, d_pad), x.dtype),
        grid_spec=pltpu.PrefetchScalarGridSpec(
            num_scalar_prefetch=0,
            grid=(t_pad // tq, n_kv_blocks),
            in_specs=[
                # Q slab: columns [2*d_pad, 3*d_pad), resident across kv axis.
                pl.BlockSpec((tq, d_pad), lambda qi, ki: (qi, 2)),
                # Fused K|V slab: columns [0, 2*d_pad), one DMA per kv step.
                pl.BlockSpec((tk, 2 * d_pad), lambda qi, ki: (ki, 0)),
            ],
            out_specs=pl.BlockSpec((tq, d_pad), lambda qi, ki: (qi, 0)),
            scratch_shapes=[
                pltpu.VMEM((tq, 1), jnp.float32),      # running max
                pltpu.VMEM((tq, 1), jnp.float32),      # running denom
                pltpu.VMEM((tq, d_pad), jnp.float32),  # accumulator
            ],
        ),
        compiler_params=pltpu.CompilerParams(
            dimension_semantics=("parallel", "arbitrary"),
            vmem_limit_bytes=_VMEM_LIMIT),
    )(qkv, qkv)

    return out_pad[:T, :d_out]


# ------------------------------ Reference ----------------------------------
def _reference(x, wq, wk, wv):
    q = x @ wq
    k = x @ wk
    v = x @ wv
    scores = q @ k.T
    w = jax.nn.softmax(scores / (k.shape[-1] ** 0.5), axis=-1)
    return w @ v


if __name__ == "__main__":
    # Shapes from the chapter: inputs is (6, 3), d_out = 2.
    inputs = jnp.array([[0.43, 0.15, 0.89],
                        [0.55, 0.87, 0.66],
                        [0.57, 0.85, 0.64],
                        [0.22, 0.58, 0.33],
                        [0.77, 0.25, 0.10],
                        [0.05, 0.80, 0.55]], dtype=jnp.float32)
    seq_len, d_in = inputs.shape
    d_out = 2

    key = jax.random.PRNGKey(0)
    kq, kk, kv = jax.random.split(key, 3)
    # SelfAttention_v1 uses torch.rand(d_in, d_out): U[0, 1), shape (d_in, d_out).
    w_query = jax.random.uniform(kq, (d_in, d_out), jnp.float32)
    w_key = jax.random.uniform(kk, (d_in, d_out), jnp.float32)
    w_value = jax.random.uniform(kv, (d_in, d_out), jnp.float32)

    out = self_attention_v1(inputs, w_query, w_key, w_value)
    out = jax.block_until_ready(out)

    ref = _reference(inputs, w_query, w_key, w_value)
    assert out.shape == (seq_len, d_out)
    # Tolerance accounts for the bf16 QKV intermediate (f32 accumulation) and
    # the approximate (EUP) reciprocal in the softmax normalization.
    assert jnp.allclose(out, ref, atol=2e-2, rtol=2e-2), "mismatch vs reference"

    print("KERNEL_OK")
</pallas_src>

<mosaic_0001>
module attributes {stable_mosaic.version = 11 : i64} {
  func.func @_qkv_proj_kernel(%arg0: i32, %arg1: i32, %arg2: memref<8x3xf32, #tpu.memory_space<vmem>>, %arg3: memref<3x384xf32, #tpu.memory_space<vmem>>, %arg4: memref<8x384xbf16, #tpu.memory_space<vmem>>) attributes {dimension_semantics = [#tpu.dimension_semantics<parallel>, #tpu.dimension_semantics<parallel>], iteration_bounds = array<i64: 1, 1>, scalar_prefetch = 0 : i64, scratch_operands = 0 : i64, tpu.core_type = #tpu.core_type<tc>, window_params = [{transform_indices = @transform_0, window_bounds = array<i64: 8, 3>}, {transform_indices = @transform_1, window_bounds = array<i64: 3, 384>}, {transform_indices = @transform_2, window_bounds = array<i64: 8, 384>}]} {
    %c0 = arith.constant 0 : index
    %c0_0 = arith.constant 0 : index
    %0 = vector.load %arg2[%c0, %c0_0] : memref<8x3xf32, #tpu.memory_space<vmem>>, vector<8x3xf32>
    %c0_1 = arith.constant 0 : index
    %c0_2 = arith.constant 0 : index
    %1 = vector.load %arg3[%c0_1, %c0_2] : memref<3x384xf32, #tpu.memory_space<vmem>>, vector<3x384xf32>
    %cst = arith.constant dense<0.000000e+00> : vector<8x384xf32>
    %2 = tpu.matmul %0, %1, %cst {dimension_numbers = #tpu.dot_dimension_numbers<[1], [0], [0], [1], [0, 0, 1, 1], [], []>} : vector<8x3xf32>, vector<3x384xf32>, vector<8x384xf32> -> vector<8x384xf32>
    %3 = arith.truncf %2 : vector<8x384xf32> to vector<8x384xbf16>
    %c0_3 = arith.constant 0 : index
    %c0_4 = arith.constant 0 : index
    %4 = vector.load %arg4[%c0_3, %c0_4] : memref<8x384xbf16, #tpu.memory_space<vmem>>, vector<8x384xbf16>
    tpu.vector_store %arg4[%c0_3, %c0_4], %3 {strides = array<i32>} : memref<8x384xbf16, #tpu.memory_space<vmem>>, vector<8x384xbf16>,
    return
  }
  func.func @transform_0(%arg0: i32, %arg1: i32) -> (i32, i32) {
    %c0_i32 = arith.constant 0 : i32
    %c0_i32_0 = arith.constant 0 : i32
    return %arg0, %c0_i32 : i32, i32
  }
  func.func @transform_1(%arg0: i32, %arg1: i32) -> (i32, i32) {
    %c0_i32 = arith.constant 0 : i32
    %c0_i32_0 = arith.constant 0 : i32
    return %c0_i32, %arg1 : i32, i32
  }
  func.func @transform_2(%arg0: i32, %arg1: i32) -> (i32, i32) {
    %c0_i32 = arith.constant 0 : i32
    return %arg0, %arg1 : i32, i32
  }
}

</mosaic_0001>

<llo_original>
// kernel: tpu_custom_call.1
$region0: #{tpu_custom_call.1}
  #allocation0 [shape = 'u32[]', space=smem, size = 0x4, offset = 0x4, fixed_abs, tag = 'smem constant byte address 0x4 - core index']
  #allocation1 [shape = 'u32[144,128]{1,0:T(1,128)}', space=vmem, size = 0x12000, scoped, tag = 'internal scratch']
  %s0 = inlined_call_operand.vmem [shape: f32[8,3], index: 0, kind: input, shape index: {}]
  %s1 = inlined_call_operand.vmem [shape: f32[3,384], index: 1, kind: input, shape index: {}]
  %s2 = inlined_call_operand.hbm [shape: bf16[8,384], index: 2, kind: output, shape index: {}]
  %s3 = sld [smem:[#allocation0]]
  $region18: #{tpu_custom_call.1} parent=0
    _
  %s5 = ssub.s32 1, %s3
  %s6 = scalar_select 0, %s5, %s3
  $region1: #{tpu_custom_call.1} parent=0
    #allocation2 [shape = 'u8[6144]{0}', space=vmem, size = 0x1800, scoped, tag = 'output window, operand 0, single buffered']
    #allocation3 [shape = 's32[1]{0}', space=sflag, size = 0x4, scoped, tag = 'scoped memory for tpu_custom_call.1']
    %7 = vsyncpa [#allocation3], 0
    // Predicated region
    $region2: #{tpu_custom_call.1} parent=1 // pred_check
      _
    $region3: #{tpu_custom_call.1} parent=1 // pred_check_branch
      %9 = sbr.rel (0) target = $region5
    $region4: #{tpu_custom_call.1} parent=1 // pred_region
      _
    $region5: #{tpu_custom_call.1} parent=1 // pred_fallthru
      _
    // Predicated region
    $region6: #{tpu_custom_call.1} parent=1 // pred_check
      _
    $region7: #{tpu_custom_call.1} parent=1 // pred_check_branch
      %11 = sbr.rel (0) target = $region9
    $region8: #{tpu_custom_call.1} parent=1 // pred_region
      _
    $region9: #{tpu_custom_call.1} parent=1 // pred_fallthru
      _
    %v12 = vld [vmem:[%s0] sm:$0xff]
    %v13 = vld [vmem:[%s1] sm:$0x77]
    %v14 = vld [vmem:[%s1 + $0x8] sm:$0x7]
    %v17 = vcombine.high %v13, %v13
    %vm18 = vcmask 23552
    %v20 = vsel %vm18, %v12, 0
    %vm22 = vcmask 1042432
    %v23 = vsel %vm22, %v13, 0
    %v25 = vsel %vm22, %v17, 0
    %v27 = vsel %vm22, %v14, 0
    %29 = vmatprep.subr.mxu0 %v25
    %30 = vmatpush1.msra.mxu0 %v23
    %31 = vmatprep.subr.mxu0 0.0
    %32 = vmatpush1.msra.mxu0 0.0
    %33 = vmatprep.subr.mxu0 0.0
    %34 = vmatpush1.msra.mxu0 0.0
    %35 = vmatprep.subr.mxu0 0.0
    %36 = vmatpush1.msra.mxu0 0.0
    %37 = vmatprep.subr.mxu0 0.0
    %38 = vmatpush1.msra.mxu0 0.0
    %39 = vmatprep.subr.mxu0 0.0
    %40 = vmatpush1.msra.mxu0 0.0
    %41 = vmatprep.subr.mxu0 0.0
    %42 = vmatpush1.msra.mxu0 0.0
    %43 = vmatprep.subr.mxu0 0.0
    %44 = vmatpush1.msra.mxu0 0.0
    %45 = vmatprep.subr.mxu0 0.0
    %46 = vmatpush1.msra.mxu0 0.0
    %47 = vmatprep.subr.mxu0 0.0
    %48 = vmatpush1.msra.mxu0 0.0
    %49 = vmatprep.subr.mxu0 0.0
    %50 = vmatpush1.msra.mxu0 0.0
    %51 = vmatprep.subr.mxu0 0.0
    %52 = vmatpush1.msra.mxu0 0.0
    %53 = vmatprep.subr.mxu0 0.0
    %54 = vmatpush1.msra.mxu0 0.0
    %55 = vmatprep.subr.mxu0 0.0
    %56 = vmatpush1.msra.mxu0 0.0
    %57 = vmatprep.subr.mxu0 0.0
    %58 = vmatpush1.msra.mxu0 0.0
    %59 = vmatprep.subr.mxu0 0.0
    %60 = vmatpush1.msra.mxu0 0.0
    %61 = vmatprep.subr.mxu0 0.0
    %62 = vmatpush1.msra.mxu0 0.0
    %63 = vmatprep.subr.mxu0 0.0
    %64 = vmatpush1.msra.mxu0 0.0
    %65 = vmatprep.subr.mxu0 0.0
    %66 = vmatpush1.msra.mxu0 0.0
    %67 = vmatprep.subr.mxu0 0.0
    %68 = vmatpush1.msra.mxu0 0.0
    %69 = vmatprep.subr.mxu0 0.0
    %70 = vmatpush1.msra.mxu0 0.0
    %71 = vmatprep.subr.mxu0 0.0
    %72 = vmatpush1.msra.mxu0 0.0
    %73 = vmatprep.subr.mxu0 0.0
    %74 = vmatpush1.msra.mxu0 0.0
    %75 = vmatprep.subr.mxu0 0.0
    %76 = vmatpush1.msra.mxu0 0.0
    %77 = vmatprep.subr.mxu0 0.0
    %78 = vmatpush1.msra.mxu0 0.0
    %79 = vmatprep.subr.mxu0 0.0
    %80 = vmatpush1.msra.mxu0 0.0
    %81 = vmatprep.subr.mxu0 0.0
    %82 = vmatpush1.msra.mxu0 0.0
    %83 = vmatprep.subr.mxu0 0.0
    %84 = vmatpush1.msra.mxu0 0.0
    %85 = vmatprep.subr.mxu0 0.0
    %86 = vmatpush1.msra.mxu0 0.0
    %87 = vmatprep.subr.mxu0 0.0
    %88 = vmatpush1.msra.mxu0 0.0
    %89 = vmatprep.subr.mxu0 0.0
    %90 = vmatpush1.msra.mxu0 0.0
    %91 = vmatprep.subr.mxu0 0.0
    %92 = vmatpush1.msra.mxu0 0.0
    %93 = vmatprep.mubr.f32.mxu0 0.0
    %94 = vmatmul.mubr.f32.gmra.mrb[0].mxu0 %v20
    %v95 = vpop.f32.mrb[0].mxu0
    %v96 = vadd.f32 0.0, %v95
    %v97 = vpop.f32.mrb[0].mxu0
    %v98 = vadd.f32 0.0, %v97
    %99 = vdwg.mxu0
    %100 = vmatprep.subr.mxu0 0.0
    %101 = vmatpush1.msra.mxu0 %v27
    %102 = vmatprep.subr.mxu0 0.0
    %103 = vmatpush1.msra.mxu0 0.0
    %104 = vmatprep.subr.mxu0 0.0
    %105 = vmatpush1.msra.mxu0 0.0
    %106 = vmatprep.subr.mxu0 0.0
    %107 = vmatpush1.msra.mxu0 0.0
    %108 = vmatprep.subr.mxu0 0.0
    %109 = vmatpush1.msra.mxu0 0.0
    %110 = vmatprep.subr.mxu0 0.0
    %111 = vmatpush1.msra.mxu0 0.0
    %112 = vmatprep.subr.mxu0 0.0
    %113 = vmatpush1.msra.mxu0 0.0
    %114 = vmatprep.subr.mxu0 0.0
    %115 = vmatpush1.msra.mxu0 0.0
    %116 = vmatprep.subr.mxu0 0.0
    %117 = vmatpush1.msra.mxu0 0.0
    %118 = vmatprep.subr.mxu0 0.0
    %119 = vmatpush1.msra.mxu0 0.0
    %120 = vmatprep.subr.mxu0 0.0
    %121 = vmatpush1.msra.mxu0 0.0
    %122 = vmatprep.subr.mxu0 0.0
    %123 = vmatpush1.msra.mxu0 0.0
    %124 = vmatprep.subr.mxu0 0.0
    %125 = vmatpush1.msra.mxu0 0.0
    %126 = vmatprep.subr.mxu0 0.0
    %127 = vmatpush1.msra.mxu0 0.0
    %128 = vmatprep.subr.mxu0 0.0
    %129 = vmatpush1.msra.mxu0 0.0
    %130 = vmatprep.subr.mxu0 0.0
    %131 = vmatpush1.msra.mxu0 0.0
    %132 = vmatprep.subr.mxu0 0.0
    %133 = vmatpush1.msra.mxu0 0.0
    %134 = vmatprep.subr.mxu0 0.0
    %135 = vmatpush1.msra.mxu0 0.0
    %136 = vmatprep.subr.mxu0 0.0
    %137 = vmatpush1.msra.mxu0 0.0
    %138 = vmatprep.subr.mxu0 0.0
    %139 = vmatpush1.msra.mxu0 0.0
    %140 = vmatprep.subr.mxu0 0.0
    %141 = vmatpush1.msra.mxu0 0.0
    %142 = vmatprep.subr.mxu0 0.0
    %143 = vmatpush1.msra.mxu0 0.0
    %144 = vmatprep.subr.mxu0 0.0
    %145 = vmatpush1.msra.mxu0 0.0
    %146 = vmatprep.subr.mxu0 0.0
    %147 = vmatpush1.msra.mxu0 0.0
    %148 = vmatprep.subr.mxu0 0.0
    %149 = vmatpush1.msra.mxu0 0.0
    %150 = vmatprep.subr.mxu0 0.0
    %151 = vmatpush1.msra.mxu0 0.0
    %152 = vmatprep.subr.mxu0 0.0
    %153 = vmatpush1.msra.mxu0 0.0
    %154 = vmatprep.subr.mxu0 0.0
    %155 = vmatpush1.msra.mxu0 0.0
    %156 = vmatprep.subr.mxu0 0.0
    %157 = vmatpush1.msra.mxu0 0.0
    %158 = vmatprep.subr.mxu0 0.0
    %159 = vmatpush1.msra.mxu0 0.0
    %160 = vmatprep.subr.mxu0 0.0
    %161 = vmatpush1.msra.mxu0 0.0
    %162 = vmatprep.subr.mxu0 0.0
    %163 = vmatpush1.msra.mxu0 0.0
    %164 = vmatprep.mubr.f32.mxu0 0.0
    %165 = vmatmul.mubr.f32.gmra.mrb[0].mxu0 %v20
    %v166 = vpop.f32.mrb[0].mxu0
    %v167 = vadd.f32 0.0, %v166
    %v168 = vpop.f32.mrb[0].mxu0
    %169 = vdwg.mxu0
    %v170 = vpack.c.bf16 %v96, %v96
    %v171 = vpack.c.bf16 %v98, %v98
    %v172 = vpack.c.bf16 %v167, %v167
    %v176 = vunpack.c.l.b16 %v170
    %v177 = vunpack.c.l.b16 %v171
    %v178 = vunpack.c.l.b16 %v172
    %v179 = vpack.c.b16 %v177, %v176
    %v180 = vpack.c.b16 %v178, %v178
    %183 = vst [vmem:[#allocation2] sm:$0xff] %v179
    %184 = vst [vmem:[#allocation2 + $0x8] sm:$0xf] %v180
    // Predicated region
    $region10: #{tpu_custom_call.1} parent=1 // pred_check
      _
    $region11: #{tpu_custom_call.1} parent=1 // pred_check_branch
      %186 = sbr.rel (0) target = $region13
    $region12: #{tpu_custom_call.1} parent=1 // pred_region
      %s188 = ssub.s32 192, 192
      %189 = vsyncadd [#allocation3], %s188
      %s191 = sshll.u32 [#allocation2], 4
      %s192 = int_to_ptr.vmem [resolvable:$true] %s191
      %194 = dma.vmem_to_hbm [thread:$0]  %s192, 192, %s2, [#allocation3]
    $region13: #{tpu_custom_call.1} parent=1 // pred_fallthru
      _
    // Predicated region
    $region14: #{tpu_custom_call.1} parent=1 // pred_check
      _
    $region15: #{tpu_custom_call.1} parent=1 // pred_check_branch
      %196 = sbr.rel (0) target = $region17
    $region16: #{tpu_custom_call.1} parent=1 // pred_region
      %197 = dma.done [#allocation3], 192
    $region17: #{tpu_custom_call.1} parent=1 // pred_fallthru
      _
    %198 = vsyncpa [#allocation3], 1

</llo_original>
